<compile_context>
chip_gen: v5e
topology: v5e:2x2
jax: 0.10.0
libtpu: 0.0.40
codegen_flags: <defaults>
</compile_context>

<pallas_src>
import functools

import jax
import jax.numpy as jnp
from jax.experimental import pallas as pl
from jax.experimental.pallas import tpu as pltpu

BN_EPS = 1e-5


def _mlp_kernel(x_ref, w1_ref, g_ref, beta_ref, w2_ref, b2_ref, o_ref, hact_ref, *,
                n_inv, use_cache):
    p = pl.program_id(0)  # projection tiles (outer)
    j = pl.program_id(1)  # hidden (reduction) tiles (inner)

    @pl.when(j == 0)
    def _():
        # Fold b2 into the accumulator init (removes the old epilogue RMW pass).
        o_ref[...] = jnp.broadcast_to(b2_ref[...], o_ref.shape)

    def compute_hact():
        # Linear1 slice: (N, tile_h), bf16 operands, f32 accumulate.
        h = jnp.dot(x_ref[...], w1_ref[...], preferred_element_type=jnp.float32)
        # BatchNorm1d (training mode, biased variance), folded into scale/shift.
        # Stats are per-feature over the batch, so hidden-axis tiling is exact.
        mean = jnp.sum(h, axis=0, keepdims=True) * n_inv
        ex2 = jnp.sum(h * h, axis=0, keepdims=True) * n_inv
        var = jnp.maximum(ex2 - mean * mean, 0.0)   # clamp f32 cancellation
        scale = g_ref[...] * jax.lax.rsqrt(var + BN_EPS)
        shift = beta_ref[...] - mean * scale
        return jnp.maximum(h * scale + shift, 0.0)

    if use_cache:
        # Compute Linear1 + BN + ReLU only during the first projection sweep and
        # cache the activated slice; later p tiles reuse it straight from VMEM.
        @pl.when(p == 0)
        def _():
            hact_ref[j] = compute_hact().astype(hact_ref.dtype)
        h_act = hact_ref[j]
    else:
        h_act = compute_hact().astype(w2_ref.dtype)

    # Linear2 partial product accumulated directly into the resident f32 output block.
    o_ref[...] += jnp.dot(h_act, w2_ref[...], preferred_element_type=jnp.float32)


def _vmem_capacity_bytes():
    try:
        info = pltpu.get_tpu_info()
        cap = getattr(info, "vmem_capacity_bytes", None)
        if cap:
            return int(cap)
    except Exception:
        pass
    return 64 * 1024 * 1024  # conservative fallback (v7x per-core VMEM)


def mlp_forward(x, w1, b1, gamma, beta, w2, b2, *, compute_dtype=jnp.bfloat16):
    """x: (N, dim); w1: (dim, H); b1/gamma/beta: (1, H); w2: (H, P); b2: (1, P)."""
    del b1  # Exactly cancelled by BatchNorm's mean subtraction (dead work).
    # TODO(synk): BatchNorm1d running-stat (momentum) buffer updates are a training-time
    # side effect and are not represented in this functional forward.

    N, dim = x.shape
    H, P = w2.shape
    assert w1.shape == (dim, H)

    cb = jnp.dtype(compute_dtype).itemsize

    # Lane-dense projection: pad P up to a multiple of 128 (unmasked vst, full MXU cols).
    P_pad = max(128, ((P + 127) // 128) * 128)
    if P_pad != P:
        w2 = jnp.pad(w2, ((0, 0), (0, P_pad - P)))
        b2 = jnp.pad(b2.reshape(1, P), ((0, 0), (0, P_pad - P)))

    # --- Tile selection (largest standard tile that divides the dim) ------------------
    tile_h = H
    for t in (512, 256, 128):
        if H % t == 0:
            tile_h = t
            break
    tile_p = P_pad
    for t in (512, 256, 128):
        if P_pad % t == 0:
            tile_p = t
            break

    # --- Generation-aware VMEM budget and tile shrink loop ----------------------------
    budget = int(0.82 * _vmem_capacity_bytes())   # ~105 MiB on 128 MiB parts, ~52 on v7x

    def est_bytes(th, tp, cache):
        return (2 * N * dim * cb               # x (resident, pipeline-buffered)
                + 2 * dim * th * cb            # W1 tiles (double-buffered)
                + 2 * th * tp * cb             # W2 tiles (double-buffered)
                + 4 * th * 4                   # gamma/beta tiles
                + 2 * tp * 4                   # b2 tile
                + 2 * N * tp * 4               # resident f32 output block
                + 2 * N * th * 4               # h / h_act f32 intermediates
                + (N * H * cb if cache else 0))  # persistent h_act cache

    use_cache = True
    while True:
        est = est_bytes(tile_h, tile_p, use_cache)
        if int(1.5 * est) <= budget:
            break
        if tile_h >= 256 and H % (tile_h // 2) == 0:
            tile_h //= 2
        elif tile_p >= 256:
            tile_p //= 2
        elif use_cache:
            use_cache = False
        else:
            break
    vmem_limit = int(min(max(int(1.5 * est), 32 * 1024 * 1024), budget))

    nj = H // tile_h
    np_ = P_pad // tile_p
    grid = (np_, nj)  # reduction (hidden) axis last

    gamma = gamma.reshape(1, H).astype(jnp.float32)
    beta = beta.reshape(1, H).astype(jnp.float32)
    b2 = b2.reshape(1, P_pad).astype(jnp.float32)

    x_c = x.astype(compute_dtype)
    w1_c = w1.astype(compute_dtype)
    w2_c = w2.astype(compute_dtype)

    # W1 / gamma / beta are only needed during p == 0; for p > 0 collapse their block
    # index to the last block of the p == 0 sweep so the pipeline skips the DMA.
    if use_cache:
        w1_like_map = lambda p, j: (0, jnp.where(p == 0, j, nj - 1))
        cache_slabs = nj
        dim_sem = ("arbitrary", "arbitrary")   # p == 0 must execute first (cache fill)
    else:
        w1_like_map = lambda p, j: (0, j)
        cache_slabs = 1                         # dummy scratch, unused
        dim_sem = ("parallel", "arbitrary")

    cost = pl.CostEstimate(
        flops=int(2 * N * dim * H + 2 * N * H * P_pad),
        transcendentals=int(H),
        bytes_accessed=int((N * dim + dim * H + H * P_pad) * cb
                           + (2 * H + P_pad) * 4 + N * P_pad * 4),
    )

    out = pl.pallas_call(
        functools.partial(_mlp_kernel, n_inv=1.0 / N, use_cache=use_cache),
        out_shape=jax.ShapeDtypeStruct((N, P_pad), jnp.float32),
        grid_spec=pltpu.PrefetchScalarGridSpec(
            num_scalar_prefetch=0,
            grid=grid,
            in_specs=[
                pl.BlockSpec((N, dim), lambda p, j: (0, 0)),          # x (full, resident)
                pl.BlockSpec((dim, tile_h), w1_like_map),             # W1 column tile
                pl.BlockSpec((1, tile_h), w1_like_map),               # gamma tile
                pl.BlockSpec((1, tile_h), w1_like_map),               # beta tile
                pl.BlockSpec((tile_h, tile_p), lambda p, j: (j, p)),  # W2 tile
                pl.BlockSpec((1, tile_p), lambda p, j: (0, p)),       # b2 tile
            ],
            out_specs=pl.BlockSpec((N, tile_p), lambda p, j: (0, p)),
            scratch_shapes=[pltpu.VMEM((cache_slabs, N, tile_h), compute_dtype)],
        ),
        compiler_params=pltpu.CompilerParams(
            dimension_semantics=dim_sem,
            vmem_limit_bytes=vmem_limit),
        cost_estimate=cost,
    )(x_c, w1_c, gamma, beta, w2_c, b2)

    return out[:, :P]


def mlp_reference(x, w1, b1, gamma, beta, w2, b2, compute_dtype=jnp.bfloat16):
    """PyTorch-semantic reference (includes b1, two-pass variance) at the kernel's
    matmul precision (bf16 operands, f32 accumulate; BN math in f32)."""
    h = jnp.dot(x.astype(compute_dtype), w1.astype(compute_dtype),
                preferred_element_type=jnp.float32) + b1
    mean = jnp.mean(h, axis=0, keepdims=True)
    var = jnp.mean((h - mean) ** 2, axis=0, keepdims=True)
    h = (h - mean) * jax.lax.rsqrt(var + BN_EPS) * gamma + beta
    h = jnp.maximum(h, 0.0)
    return jnp.dot(h.astype(compute_dtype), w2.astype(compute_dtype),
                   preferred_element_type=jnp.float32) + b2


if __name__ == "__main__":
    # Small shapes consistent with MLP(dim, projection_size, hidden_size)
    N, dim, hidden, proj = 8, 32, 256, 16

    key = jax.random.PRNGKey(0)
    kx, k1, kb1, k2, kb2 = jax.random.split(key, 5)

    x = jax.random.normal(kx, (N, dim), dtype=jnp.float32)

    # Deterministic synthetic parameters (not loaded from a checkpoint).
    w1 = jax.random.normal(k1, (dim, hidden), dtype=jnp.float32) * (1.0 / dim ** 0.5)
    b1 = jax.random.normal(kb1, (1, hidden), dtype=jnp.float32) * 0.01
    gamma = jnp.ones((1, hidden), dtype=jnp.float32)   # BatchNorm1d default weight
    beta = jnp.zeros((1, hidden), dtype=jnp.float32)   # BatchNorm1d default bias
    w2 = jax.random.normal(k2, (hidden, proj), dtype=jnp.float32) * (1.0 / hidden ** 0.5)
    b2 = jax.random.normal(kb2, (1, proj), dtype=jnp.float32) * 0.01

    out = mlp_forward(x, w1, b1, gamma, beta, w2, b2)
    out = jax.block_until_ready(out)

    ref = mlp_reference(x, w1, b1, gamma, beta, w2, b2)
    assert out.shape == (N, proj)
    assert jnp.all(jnp.isfinite(out)), "non-finite output"
    assert jnp.allclose(out, ref, atol=2e-2, rtol=2e-2), "mismatch vs reference"

    print("KERNEL_OK")
</pallas_src>

<mosaic_0001>
module attributes {stable_mosaic.version = 11 : i64} {
  func.func @_mlp_kernel(%arg0: i32, %arg1: i32, %arg2: memref<8x32xbf16, #tpu.memory_space<vmem>>, %arg3: memref<32x256xbf16, #tpu.memory_space<vmem>>, %arg4: memref<1x256xf32, #tpu.memory_space<vmem>>, %arg5: memref<1x256xf32, #tpu.memory_space<vmem>>, %arg6: memref<256x128xbf16, #tpu.memory_space<vmem>>, %arg7: memref<1x128xf32, #tpu.memory_space<vmem>>, %arg8: memref<8x128xf32, #tpu.memory_space<vmem>>, %arg9: memref<1x8x256xbf16, #tpu.memory_space<vmem>>) attributes {dimension_semantics = [#tpu.dimension_semantics<arbitrary>, #tpu.dimension_semantics<arbitrary>], iteration_bounds = array<i64: 1, 1>, scalar_prefetch = 0 : i64, scratch_operands = 1 : i64, tpu.core_type = #tpu.core_type<tc>, window_params = [{pipeline_mode = #tpu.pipeline_mode<synchronous>, transform_indices = @transform_0, window_bounds = array<i64: 8, 32>}, {transform_indices = @transform_1, window_bounds = array<i64: 32, 256>}, {transform_indices = @transform_2, window_bounds = array<i64: 1, 256>}, {transform_indices = @transform_3, window_bounds = array<i64: 1, 256>}, {transform_indices = @transform_4, window_bounds = array<i64: 256, 128>}, {transform_indices = @transform_5, window_bounds = array<i64: 1, 128>}, {transform_indices = @transform_6, window_bounds = array<i64: 8, 128>}]} {
    %c0_i32 = arith.constant 0 : i32
    %0 = arith.cmpi eq, %arg1, %c0_i32 : i32
    %1 = arith.extui %0 : i1 to i32
    %c0_i32_0 = arith.constant 0 : i32
    %2 = arith.cmpi ne, %1, %c0_i32_0 : i32
    scf.if %2 {
      %c0_10 = arith.constant 0 : index
      %c0_11 = arith.constant 0 : index
      %14 = vector.load %arg7[%c0_10, %c0_11] : memref<1x128xf32, #tpu.memory_space<vmem>>, vector<1x128xf32>
      %15 = vector.shape_cast %14 : vector<1x128xf32> to vector<1x128xf32>
      %16 = vector.broadcast %15 : vector<1x128xf32> to vector<8x128xf32>
      %c0_12 = arith.constant 0 : index
      %c0_13 = arith.constant 0 : index
      %17 = vector.load %arg8[%c0_12, %c0_13] : memref<8x128xf32, #tpu.memory_space<vmem>>, vector<8x128xf32>
      tpu.vector_store %arg8[%c0_12, %c0_13], %16 {strides = array<i32>} : memref<8x128xf32, #tpu.memory_space<vmem>>, vector<8x128xf32>,
    } else {
    }
    %c0_i32_1 = arith.constant 0 : i32
    %3 = arith.cmpi eq, %arg0, %c0_i32_1 : i32
    %4 = arith.extui %3 : i1 to i32
    %c0_i32_2 = arith.constant 0 : i32
    %5 = arith.cmpi ne, %4, %c0_i32_2 : i32
    scf.if %5 {
      %c0_10 = arith.constant 0 : index
      %c0_11 = arith.constant 0 : index
      %14 = vector.load %arg2[%c0_10, %c0_11] : memref<8x32xbf16, #tpu.memory_space<vmem>>, vector<8x32xbf16>
      %c0_12 = arith.constant 0 : index
      %c0_13 = arith.constant 0 : index
      %15 = vector.load %arg3[%c0_12, %c0_13] : memref<32x256xbf16, #tpu.memory_space<vmem>>, vector<32x256xbf16>
      %cst_14 = arith.constant dense<0.000000e+00> : vector<8x256xf32>
      %16 = tpu.matmul %14, %15, %cst_14 {dimension_numbers = #tpu.dot_dimension_numbers<[1], [0], [0], [1], [0, 0, 1, 1], [], []>} : vector<8x32xbf16>, vector<32x256xbf16>, vector<8x256xf32> -> vector<8x256xf32>
      %cst_15 = arith.constant dense<0.000000e+00> : vector<256xf32>
      %17 = vector.multi_reduction <add>, %16, %cst_15 [0] : vector<8x256xf32> to vector<256xf32>
      %18 = vector.shape_cast %17 : vector<256xf32> to vector<1x256xf32>
      %cst_16 = arith.constant 1.250000e-01 : f32
      %19 = vector.broadcast %cst_16 : f32 to vector<1x256xf32>
      %20 = arith.mulf %18, %19 : vector<1x256xf32>
      %21 = arith.mulf %16, %16 : vector<8x256xf32>
      %cst_17 = arith.constant dense<0.000000e+00> : vector<256xf32>
      %22 = vector.multi_reduction <add>, %21, %cst_17 [0] : vector<8x256xf32> to vector<256xf32>
      %23 = vector.shape_cast %22 : vector<256xf32> to vector<1x256xf32>
      %cst_18 = arith.constant 1.250000e-01 : f32
      %24 = vector.broadcast %cst_18 : f32 to vector<1x256xf32>
      %25 = arith.mulf %23, %24 : vector<1x256xf32>
      %26 = arith.mulf %20, %20 : vector<1x256xf32>
      %27 = arith.subf %25, %26 : vector<1x256xf32>
      %cst_19 = arith.constant 0.000000e+00 : f32
      %28 = vector.broadcast %cst_19 : f32 to vector<1x256xf32>
      %29 = arith.maximumf %27, %28 : vector<1x256xf32>
      %c0_20 = arith.constant 0 : index
      %c0_21 = arith.constant 0 : index
      %30 = vector.load %arg4[%c0_20, %c0_21] : memref<1x256xf32, #tpu.memory_space<vmem>>, vector<1x256xf32>
      %cst_22 = arith.constant 9.99999974E-6 : f32
      %31 = vector.broadcast %cst_22 : f32 to vector<1x256xf32>
      %32 = arith.addf %29, %31 : vector<1x256xf32>
      %33 = math.rsqrt %32 : vector<1x256xf32>
      %34 = arith.mulf %30, %33 : vector<1x256xf32>
      %c0_23 = arith.constant 0 : index
      %c0_24 = arith.constant 0 : index
      %35 = vector.load %arg5[%c0_23, %c0_24] : memref<1x256xf32, #tpu.memory_space<vmem>>, vector<1x256xf32>
      %36 = arith.mulf %20, %34 : vector<1x256xf32>
      %37 = arith.subf %35, %36 : vector<1x256xf32>
      %38 = vector.broadcast %34 : vector<1x256xf32> to vector<8x256xf32>
      %39 = arith.mulf %16, %38 : vector<8x256xf32>
      %40 = vector.broadcast %37 : vector<1x256xf32> to vector<8x256xf32>
      %41 = arith.addf %39, %40 : vector<8x256xf32>
      %cst_25 = arith.constant 0.000000e+00 : f32
      %42 = vector.broadcast %cst_25 : f32 to vector<8x256xf32>
      %43 = arith.maximumf %41, %42 : vector<8x256xf32>
      %44 = arith.truncf %43 : vector<8x256xf32> to vector<8x256xbf16>
      %45 = arith.index_cast %arg1 : i32 to index
      %c0_26 = arith.constant 0 : index
      %c0_27 = arith.constant 0 : index
      %46 = vector.load %arg9[%45, %c0_26, %c0_27] : memref<1x8x256xbf16, #tpu.memory_space<vmem>>, vector<1x8x256xbf16>
      %47 = vector.shape_cast %46 : vector<1x8x256xbf16> to vector<8x256xbf16>
      %48 = vector.shape_cast %44 : vector<8x256xbf16> to vector<1x8x256xbf16>
      tpu.vector_store %arg9[%45, %c0_26, %c0_27], %48 {strides = array<i32>} : memref<1x8x256xbf16, #tpu.memory_space<vmem>>, vector<1x8x256xbf16>,
    } else {
    }
    %6 = arith.index_cast %arg1 : i32 to index
    %c0 = arith.constant 0 : index
    %c0_3 = arith.constant 0 : index
    %7 = vector.load %arg9[%6, %c0, %c0_3] : memref<1x8x256xbf16, #tpu.memory_space<vmem>>, vector<1x8x256xbf16>
    %8 = vector.shape_cast %7 : vector<1x8x256xbf16> to vector<8x256xbf16>
    %c0_4 = arith.constant 0 : index
    %c0_5 = arith.constant 0 : index
    %9 = vector.load %arg8[%c0_4, %c0_5] : memref<8x128xf32, #tpu.memory_space<vmem>>, vector<8x128xf32>
    %c0_6 = arith.constant 0 : index
    %c0_7 = arith.constant 0 : index
    %10 = vector.load %arg6[%c0_6, %c0_7] : memref<256x128xbf16, #tpu.memory_space<vmem>>, vector<256x128xbf16>
    %cst = arith.constant dense<0.000000e+00> : vector<8x128xf32>
    %11 = tpu.matmul %8, %10, %cst {dimension_numbers = #tpu.dot_dimension_numbers<[1], [0], [0], [1], [0, 0, 1, 1], [], []>} : vector<8x256xbf16>, vector<256x128xbf16>, vector<8x128xf32> -> vector<8x128xf32>
    %12 = arith.addf %9, %11 : vector<8x128xf32>
    %c0_8 = arith.constant 0 : index
    %c0_9 = arith.constant 0 : index
    %13 = vector.load %arg8[%c0_8, %c0_9] : memref<8x128xf32, #tpu.memory_space<vmem>>, vector<8x128xf32>
    tpu.vector_store %arg8[%c0_8, %c0_9], %12 {strides = array<i32>} : memref<8x128xf32, #tpu.memory_space<vmem>>, vector<8x128xf32>,
    return
  }
  func.func @transform_0(%arg0: i32, %arg1: i32) -> (i32, i32) {
    %c0_i32 = arith.constant 0 : i32
    %c0_i32_0 = arith.constant 0 : i32
    %c0_i32_1 = arith.constant 0 : i32
    return %c0_i32, %c0_i32_0 : i32, i32
  }
  func.func @transform_1(%arg0: i32, %arg1: i32) -> (i32, i32) {
    %c0_i32 = arith.constant 0 : i32
    %0 = arith.cmpi eq, %arg0, %c0_i32 : i32
    %c0_i32_0 = arith.constant 0 : i32
    %1 = arith.select %0, %arg1, %c0_i32_0 : i32
    %c0_i32_1 = arith.constant 0 : i32
    %c0_i32_2 = arith.constant 0 : i32
    return %c0_i32_1, %1 : i32, i32
  }
  func.func @transform_2(%arg0: i32, %arg1: i32) -> (i32, i32) {
    %c0_i32 = arith.constant 0 : i32
    %0 = arith.cmpi eq, %arg0, %c0_i32 : i32
    %c0_i32_0 = arith.constant 0 : i32
    %1 = arith.select %0, %arg1, %c0_i32_0 : i32
    %c0_i32_1 = arith.constant 0 : i32
    %c0_i32_2 = arith.constant 0 : i32
    return %c0_i32_1, %1 : i32, i32
  }
  func.func @transform_3(%arg0: i32, %arg1: i32) -> (i32, i32) {
    %c0_i32 = arith.constant 0 : i32
    %0 = arith.cmpi eq, %arg0, %c0_i32 : i32
    %c0_i32_0 = arith.constant 0 : i32
    %1 = arith.select %0, %arg1, %c0_i32_0 : i32
    %c0_i32_1 = arith.constant 0 : i32
    %c0_i32_2 = arith.constant 0 : i32
    return %c0_i32_1, %1 : i32, i32
  }
  func.func @transform_4(%arg0: i32, %arg1: i32) -> (i32, i32) {
    %c0_i32 = arith.constant 0 : i32
    return %arg1, %arg0 : i32, i32
  }
  func.func @transform_5(%arg0: i32, %arg1: i32) -> (i32, i32) {
    %c0_i32 = arith.constant 0 : i32
    %c0_i32_0 = arith.constant 0 : i32
    return %c0_i32, %arg0 : i32, i32
  }
  func.func @transform_6(%arg0: i32, %arg1: i32) -> (i32, i32) {
    %c0_i32 = arith.constant 0 : i32
    %c0_i32_0 = arith.constant 0 : i32
    return %c0_i32, %arg0 : i32, i32
  }
}

</mosaic_0001>

<llo_original>
// kernel: tpu_custom_call.1
$region0: #{tpu_custom_call.1}
  #allocation0 [shape = 'u32[]', space=smem, size = 0x4, offset = 0x4, fixed_abs, tag = 'smem constant byte address 0x4 - core index']
  #allocation1 [shape = 'u32[72,128]{1,0:T(1,128)}', space=vmem, size = 0x9000, scoped, tag = 'internal scratch']
  #allocation2 [shape = 'bf16[1,8,256]{2,1,0:T(8,128)(2,1)}', space=vmem, size = 0x1000, scoped, tag = 'scratch operand']
  %s0 = inlined_call_operand.hbm [shape: bf16[8,32], index: 0, kind: input, shape index: {}]
  %s1 = inlined_call_operand.hbm [shape: bf16[32,256], index: 1, kind: input, shape index: {}]
  %s2 = inlined_call_operand.hbm [shape: f32[1,256], index: 2, kind: input, shape index: {}]
  %s3 = inlined_call_operand.vmem [shape: f32[1,256], index: 3, kind: input, shape index: {}]
  %s4 = inlined_call_operand.hbm [shape: bf16[256,128], index: 4, kind: input, shape index: {}]
  %s5 = inlined_call_operand.vmem [shape: f32[1,128], index: 5, kind: input, shape index: {}]
  %s6 = inlined_call_operand.hbm [shape: f32[8,128], index: 6, kind: output, shape index: {}]
  %s7 = sld [smem:[#allocation0]]
  $region58: #{tpu_custom_call.1} parent=0
    _
  %s9 = ssub.s32 1, %s7
  %s10 = scalar_select 0, %s9, %s7
  $region1: #{tpu_custom_call.1} parent=0
    #allocation3 [shape = 'u8[2048]{0}', space=vmem, size = 0x800, scoped, tag = 'input window, operand 0, single buffered']
    #allocation4 [shape = 's32[1]{0}', space=sflag, size = 0x4, scoped, tag = 'scoped memory for tpu_custom_call.1']
    #allocation5 [shape = 's32[1]{0}', space=sflag, size = 0x4, scoped, tag = 'scoped memory for tpu_custom_call.1']
    #allocation6 [shape = 'u8[16384]{0}', space=vmem, size = 0x4000, scoped, tag = 'input window, operand 1, single buffered']
    #allocation7 [shape = 's32[1]{0}', space=sflag, size = 0x4, scoped, tag = 'scoped memory for tpu_custom_call.1']
    #allocation8 [shape = 'u8[1024]{0}', space=vmem, size = 0x400, scoped, tag = 'input window, operand 2, single buffered']
    #allocation9 [shape = 'u8[65536]{0}', space=vmem, size = 0x10000, scoped, tag = 'input window, operand 4, single buffered']
    #allocation10 [shape = 's32[1]{0}', space=sflag, size = 0x4, scoped, tag = 'scoped memory for tpu_custom_call.1']
    #allocation11 [shape = 'u8[4096]{0}', space=vmem, size = 0x1000, scoped, tag = 'output window, operand 0, single buffered']
    %11 = vsyncpa [#allocation4], 0
    %12 = vsyncpa [#allocation7], 0
    %13 = vsyncpa [#allocation10], 0
    %14 = vsyncpa [#allocation5], 0
    // Predicated region
    $region2: #{tpu_custom_call.1} parent=1 // pred_check
      _
    $region3: #{tpu_custom_call.1} parent=1 // pred_check_branch
      %16 = sbr.rel (0) target = $region5
    $region4: #{tpu_custom_call.1} parent=1 // pred_region
      %18 = vsyncadd [#allocation4], 0
      %s20 = sshll.u32 %s0, 4
      %s21 = int_to_ptr.hbm [resolvable:$true] %s20
      %s22 = sshll.u32 [#allocation3], 4
      %s23 = int_to_ptr.vmem [resolvable:$true] %s22
      %25 = dma.hbm_to_vmem [thread:$0]  %s21, 64, %s23, [#allocation4]
    $region5: #{tpu_custom_call.1} parent=1 // pred_fallthru
      _
    // Predicated region
    $region6: #{tpu_custom_call.1} parent=1 // pred_check
      _
    $region7: #{tpu_custom_call.1} parent=1 // pred_check_branch
      %27 = sbr.rel (0) target = $region9
    $region8: #{tpu_custom_call.1} parent=1 // pred_region
      %p28 = scmp.eq.s32.totalorder 0, 0
      %s29 = scalar_select %p28, 0, 0
      %s30 = smul.u32 2, %s29
      %32 = vsyncadd [#allocation7], 0
      %s33 = smul.addr %s30, 4
      %s34 = scalar_lea.hbm %s1, %s33
      %s35 = sshll.u32 %s34, 4
      %s36 = int_to_ptr.hbm [resolvable:$true] %s35
      %s37 = sshll.u32 [#allocation6], 4
      %s38 = int_to_ptr.vmem [resolvable:$true] %s37
      %43 = dma.hbm_to_vmem [thread:$0]  %s36, 512, %s38, [#allocation7], 128, 128, 8
    $region9: #{tpu_custom_call.1} parent=1 // pred_fallthru
      _
    // Predicated region
    $region10: #{tpu_custom_call.1} parent=1 // pred_check
      _
    $region11: #{tpu_custom_call.1} parent=1 // pred_check_branch
      %45 = sbr.rel (0) target = $region13
    $region12: #{tpu_custom_call.1} parent=1 // pred_region
      %p46 = scmp.eq.s32.totalorder 0, 0
      %s47 = scalar_select %p46, 0, 0
      %s48 = smul.u32 2, %s47
      %50 = vsyncadd [#allocation7], 0
      %s51 = scalar_lea.hbm %s2, %s48
      %s53 = sshll.u32 %s51, 4
      %s54 = int_to_ptr.hbm [resolvable:$true] %s53
      %s55 = sshll.u32 [#allocation8], 4
      %s56 = int_to_ptr.vmem [resolvable:$true] %s55
      %58 = dma.hbm_to_vmem [thread:$0]  %s54, 32, %s56, [#allocation7]
    $region13: #{tpu_custom_call.1} parent=1 // pred_fallthru
      _
    // Predicated region
    $region14: #{tpu_custom_call.1} parent=1 // pred_check
      _
    $region15: #{tpu_custom_call.1} parent=1 // pred_check_branch
      %60 = sbr.rel (0) target = $region17
    $region16: #{tpu_custom_call.1} parent=1 // pred_region
      %p61 = scmp.eq.s32.totalorder 0, 0
      %s62 = scalar_select %p61, 0, 0
      %s63 = smul.u32 2, %s62
      %p64 = scmp.lt.s32.totalorder %s63, 1
      %s65 = scalar_select %p64, %s63, 1
      %s66 = scalar_lea.vmem %s3, %s65
      %p67 = scmp.eq.s32.totalorder 0, 0
      %s68 = scalar_select %p67, 0, 0
      %s69 = smul.u32 2, %s68
    $region17: #{tpu_custom_call.1} parent=1 // pred_fallthru
      _
    // Predicated region
    $region18: #{tpu_custom_call.1} parent=1 // pred_check
      _
    $region19: #{tpu_custom_call.1} parent=1 // pred_check_branch
      %71 = sbr.rel (0) target = $region21
    $region20: #{tpu_custom_call.1} parent=1 // pred_region
      %73 = vsyncadd [#allocation10], 0
      %s74 = sshll.u32 %s4, 4
      %s75 = int_to_ptr.hbm [resolvable:$true] %s74
      %s76 = sshll.u32 [#allocation9], 4
      %s77 = int_to_ptr.vmem [resolvable:$true] %s76
      %82 = dma.hbm_to_vmem [thread:$0]  %s75, 2048, %s77, [#allocation10], 64, 64, 4
    $region21: #{tpu_custom_call.1} parent=1 // pred_fallthru
      _
    // Predicated region
    $region22: #{tpu_custom_call.1} parent=1 // pred_check
      _
    $region23: #{tpu_custom_call.1} parent=1 // pred_check_branch
      %84 = sbr.rel (0) target = $region25
    $region24: #{tpu_custom_call.1} parent=1 // pred_region
      _
    $region25: #{tpu_custom_call.1} parent=1 // pred_fallthru
      _
    // Predicated region
    $region26: #{tpu_custom_call.1} parent=1 // pred_check
      _
    $region27: #{tpu_custom_call.1} parent=1 // pred_check_branch
      %86 = sbr.rel (0) target = $region29
    $region28: #{tpu_custom_call.1} parent=1 // pred_region
      %88 = dma.done [#allocation4], 64
    $region29: #{tpu_custom_call.1} parent=1 // pred_fallthru
      _
    // Predicated region
    $region30: #{tpu_custom_call.1} parent=1 // pred_check
      _
    $region31: #{tpu_custom_call.1} parent=1 // pred_check_branch
      %90 = sbr.rel (0) target = $region33
    $region32: #{tpu_custom_call.1} parent=1 // pred_region
      %92 = dma.done [#allocation7], 512
    $region33: #{tpu_custom_call.1} parent=1 // pred_fallthru
      _
    // Predicated region
    $region34: #{tpu_custom_call.1} parent=1 // pred_check
      _
    $region35: #{tpu_custom_call.1} parent=1 // pred_check_branch
      %94 = sbr.rel (0) target = $region37
    $region36: #{tpu_custom_call.1} parent=1 // pred_region
      %96 = dma.done [#allocation7], 32
    $region37: #{tpu_custom_call.1} parent=1 // pred_fallthru
      _
    // Predicated region
    $region38: #{tpu_custom_call.1} parent=1 // pred_check
      _
    $region39: #{tpu_custom_call.1} parent=1 // pred_check_branch
      %98 = sbr.rel (0) target = $region41
    $region40: #{tpu_custom_call.1} parent=1 // pred_region
      %100 = dma.done [#allocation10], 2048
    $region41: #{tpu_custom_call.1} parent=1 // pred_fallthru
      _
    %p101 = scmp.eq.s32.totalorder 0, 0
    %s102 = scalar_select %p101, 0, 0
    %s103 = smul.u32 2, %s102
    %p104 = scmp.lt.s32.totalorder %s103, 1
    %s105 = scalar_select %p104, %s103, 1
    %s106 = scalar_lea.vmem %s3, %s105
    %p107 = scmp.eq.s32.totalorder 0, 0
    %s108 = scalar_select %p107, 0, 0
    %s109 = smul.u32 2, %s108
    %p110 = scmp.eq.s32.totalorder 0, 0
    %s111 = scalar_select %p110, 0, 0
    %s112 = smul.u32 2, %s111
    %p113 = scmp.eq.s32.totalorder 0, 0
    %s114 = scalar_select %p113, 0, 0
    %s115 = smul.u32 2, %s114
    %p116 = scmp.lt.s32.totalorder %s115, 1
    %s117 = scalar_select %p116, %s115, 1
    %s118 = scalar_lea.vmem %s3, %s117
    %p119 = scmp.eq.s32.totalorder 0, 0
    %s120 = scalar_select %p119, 0, 0
    %s121 = smul.u32 2, %s120
    %p123 = scmp.eq.s32.totalorder 0, 0
    // Predicated region
    $region42: #{tpu_custom_call.1} parent=1 // pred_check
      %p124 = pneg %p123
    $region43: #{tpu_custom_call.1} parent=1 // pred_check_branch
      %126 = sbr.rel (%p124) target = $region45
    $region44: #{tpu_custom_call.1} parent=1 // pred_region
      %v127 = vld [vmem:[%s5] sm:$0x1]
      %v129 = vperm.slane %v127, 0
      %131 = vst [vmem:[#allocation11] sm:$0xff] %v129
    $region45: #{tpu_custom_call.1} parent=1 // pred_fallthru
      _
    %p132 = scmp.eq.s32.totalorder 0, 0
    // Predicated region
    $region46: #{tpu_custom_call.1} parent=1 // pred_check
      %p133 = pneg %p132
    $region47: #{tpu_custom_call.1} parent=1 // pred_check_branch
      %135 = sbr.rel (%p133) target = $region49
    $region48: #{tpu_custom_call.1} parent=1 // pred_region
      %v136 = vld [vmem:[#allocation3] sm:$0xf]
      %v137 = vld [vmem:[#allocation6] sm:$0xff]
      %v138 = vld [vmem:[#allocation6 + $0x8] sm:$0xff]
      %v139 = vld [vmem:[#allocation6 + $0x10] sm:$0xff]
      %v140 = vld [vmem:[#allocation6 + $0x18] sm:$0xff]
      %v145 = vunpack.c.l.b16 %v137
      %v146 = vunpack.c.h.b16 %v137
      %v147 = vunpack.c.l.b16 %v138
      %v148 = vunpack.c.h.b16 %v138
      %v149 = vunpack.c.l.b16 %v139
      %v150 = vunpack.c.h.b16 %v139
      %v151 = vunpack.c.l.b16 %v140
      %v152 = vunpack.c.h.b16 %v140
      %v153 = vpack.c.b16 %v147, %v145
      %v154 = vpack.c.b16 %v148, %v146
      %v155 = vpack.c.b16 %v151, %v149
      %v156 = vpack.c.b16 %v152, %v150
      %vm161 = vcmask 261120
      %v163 = vsel %vm161, %v136, 0
      %165 = vmatpush.bf16.msra.mxu0 0
      %166 = vmatpush.bf16.msra.mxu0 0
      %167 = vmatpush.bf16.msra.mxu0 0
      %168 = vmatpush.bf16.msra.mxu0 0
      %169 = vmatpush.bf16.msra.mxu0 0
      %170 = vmatpush.bf16.msra.mxu0 0
      %171 = vmatpush.bf16.msra.mxu0 %v155
      %172 = vmatpush.bf16.msra.mxu0 %v153
      %173 = vmatmul.bf16.gmra.mxu0 %v163
      %v174 = vpop.f32.mrf.mxu0
      %v175 = vadd.f32 0.0, %v174
      %v176 = vpop.f32.mrf.mxu0
      %177 = vdwg.mxu0
      %178 = vmatpush.bf16.msra.mxu0 0
      %179 = vmatpush.bf16.msra.mxu0 0
      %180 = vmatpush.bf16.msra.mxu0 0
      %181 = vmatpush.bf16.msra.mxu0 0
      %182 = vmatpush.bf16.msra.mxu0 0
      %183 = vmatpush.bf16.msra.mxu0 0
      %184 = vmatpush.bf16.msra.mxu0 %v156
      %185 = vmatpush.bf16.msra.mxu0 %v154
      %186 = vmatmul.bf16.gmra.mxu0 %v163
      %v187 = vpop.f32.mrf.mxu0
      %v188 = vadd.f32 0.0, %v187
      %v189 = vpop.f32.mrf.mxu0
      %190 = vdwg.mxu0
      %v191 = vrot.slane %v175, 4
      %v192 = vadd.f32 %v175, %v191
      %v193 = vrot.slane %v192, 2
      %v194 = vadd.f32 %v192, %v193
      %v195 = vrot.slane %v194, 1
      %v196 = vadd.f32 %v194, %v195
      %v197 = vrot.slane %v188, 4
      %v198 = vadd.f32 %v188, %v197
      %v199 = vrot.slane %v198, 2
      %v200 = vadd.f32 %v198, %v199
      %v201 = vrot.slane %v200, 1
      %v202 = vadd.f32 %v200, %v201
      %v203 = vmul.f32 %v196, 0.125
      %v204 = vmul.f32 %v202, 0.125
      %v205 = vmul.f32 %v175, %v175
      %v206 = vmul.f32 %v188, %v188
      %v207 = vrot.slane %v205, 4
      %v208 = vadd.f32 %v205, %v207
      %v209 = vrot.slane %v208, 2
      %v210 = vadd.f32 %v208, %v209
      %v211 = vrot.slane %v210, 1
      %v212 = vadd.f32 %v210, %v211
      %v213 = vrot.slane %v206, 4
      %v214 = vadd.f32 %v206, %v213
      %v215 = vrot.slane %v214, 2
      %v216 = vadd.f32 %v214, %v215
      %v217 = vrot.slane %v216, 1
      %v218 = vadd.f32 %v216, %v217
      %v219 = vmul.f32 %v212, 0.125
      %v220 = vmul.f32 %v218, 0.125
      %v221 = vmul.f32 %v203, %v203
      %v222 = vmul.f32 %v204, %v204
      %v223 = vsub.f32 %v219, %v221
      %v224 = vsub.f32 %v220, %v222
      %v225 = vmax.f32 %v223, 0.0
      %v226 = vmax.f32 %v224, 0.0
      %v227 = vld [vmem:[#allocation8] sm:$0x3]
      %v228 = vadd.f32 %v225, 1e-05
      %v229 = vadd.f32 %v226, 1e-05
      %v230 = vrsqrt.pop %v228
      %v231 = vmul.f32 %v230, %v228
      %v232 = vmul.f32 %v231, %v230
      %v233 = vmul.f32 0.5, %v232
      %v234 = vsub.f32 1.5, %v233
      %v235 = vmul.f32 %v230, %v234
      %vm236 = vweird.f32 %v228
      %vm237 = vweird.f32 %v230
      %vm238 = vmor %vm236, %vm237
      %v239 = vsel %vm238, %v230, %v235
      %v240 = vrsqrt.pop %v229
      %v241 = vmul.f32 %v240, %v229
      %v242 = vmul.f32 %v241, %v240
      %v243 = vmul.f32 0.5, %v242
      %v244 = vsub.f32 1.5, %v243
      %v245 = vmul.f32 %v240, %v244
      %vm246 = vweird.f32 %v229
      %vm247 = vweird.f32 %v240
      %vm248 = vmor %vm246, %vm247
      %v249 = vsel %vm248, %v240, %v245
      %v252 = vrot.slane %v249, 7
      %vm253 = vcmask 1040384
      %v254 = vsel %vm253, %v239, %v252
      %v256 = vmul.f32 %v227, %v254
      %v257 = vld [vmem:[%s118] sm:$0x3]
      %v259 = vperm.slane %v256, 0
      %v260 = vperm.slane %v256, 1
      %v263 = vmul.f32 %v203, %v259
      %v264 = vmul.f32 %v204, %v260
      %v267 = vrot.slane %v264, 7
      %v268 = vsel %vm253, %v263, %v267
      %v270 = vsub.f32 %v257, %v268
      %v271 = vmul.f32 %v175, %v259
      %v272 = vmul.f32 %v188, %v260
      %v274 = vperm.slane %v270, 0
      %v275 = vperm.slane %v270, 1
      %v278 = vadd.f32 %v271, %v274
      %v279 = vadd.f32 %v272, %v275
      %v280 = vmax.f32 %v278, 0.0
      %v281 = vmax.f32 %v279, 0.0
      %v282 = vpack.c.bf16 %v281, %v280
      %s283 = smul.u32 0, 2
      %s284 = smul.addr %s283, 4
      %s285 = scalar_lea.vmem [#allocation2], %s284
      %286 = vst [vmem:[%s285] sm:$0xff] %v282
    $region49: #{tpu_custom_call.1} parent=1 // pred_fallthru
      _
    %s287 = smul.u32 0, 2
    %s288 = smul.addr %s287, 4
    %s289 = scalar_lea.vmem [#allocation2], %s288
    %v290 = vld [vmem:[%s289] sm:$0xff]
    %v291 = vld [vmem:[#allocation11] sm:$0xff]
    %v292 = vld [vmem:[#allocation9] sm:$0xf]
    %v293 = vld [vmem:[#allocation9 + $0x4] sm:$0xf]
    %v294 = vld [vmem:[#allocation9 + $0x8] sm:$0xf]
    %v295 = vld [vmem:[#allocation9 + $0xc] sm:$0xf]
    %v296 = vld [vmem:[#allocation9 + $0x10] sm:$0xf]
    %v297 = vld [vmem:[#allocation9 + $0x14] sm:$0xf]
    %v298 = vld [vmem:[#allocation9 + $0x18] sm:$0xf]
    %v299 = vld [vmem:[#allocation9 + $0x1c] sm:$0xf]
    %v300 = vld [vmem:[#allocation9 + $0x20] sm:$0xf]
    %v301 = vld [vmem:[#allocation9 + $0x24] sm:$0xf]
    %v302 = vld [vmem:[#allocation9 + $0x28] sm:$0xf]
    %v303 = vld [vmem:[#allocation9 + $0x2c] sm:$0xf]
    %v304 = vld [vmem:[#allocation9 + $0x30] sm:$0xf]
    %v305 = vld [vmem:[#allocation9 + $0x34] sm:$0xf]
    %v306 = vld [vmem:[#allocation9 + $0x38] sm:$0xf]
    %v307 = vld [vmem:[#allocation9 + $0x3c] sm:$0xf]
    %v308 = vld [vmem:[#allocation9 + $0x40] sm:$0xf]
    %v309 = vld [vmem:[#allocation9 + $0x44] sm:$0xf]
    %v310 = vld [vmem:[#allocation9 + $0x48] sm:$0xf]
    %v311 = vld [vmem:[#allocation9 + $0x4c] sm:$0xf]
    %v312 = vld [vmem:[#allocation9 + $0x50] sm:$0xf]
    %v313 = vld [vmem:[#allocation9 + $0x54] sm:$0xf]
    %v314 = vld [vmem:[#allocation9 + $0x58] sm:$0xf]
    %v315 = vld [vmem:[#allocation9 + $0x5c] sm:$0xf]
    %v316 = vld [vmem:[#allocation9 + $0x60] sm:$0xf]
    %v317 = vld [vmem:[#allocation9 + $0x64] sm:$0xf]
    %v318 = vld [vmem:[#allocation9 + $0x68] sm:$0xf]
    %v319 = vld [vmem:[#allocation9 + $0x6c] sm:$0xf]
    %v320 = vld [vmem:[#allocation9 + $0x70] sm:$0xf]
    %v321 = vld [vmem:[#allocation9 + $0x74] sm:$0xf]
    %v322 = vld [vmem:[#allocation9 + $0x78] sm:$0xf]
    %v323 = vld [vmem:[#allocation9 + $0x7c] sm:$0xf]
    %v325 = vunpack.c.l.b16 %v290
    %v326 = vunpack.c.h.b16 %v290
    %v327 = vpack.c.b16 %v325, %v325
    %v328 = vpack.c.b16 %v326, %v326
    %v363 = vunpack.c.l.b16 %v292
    %v364 = vunpack.c.l.b16 %v293
    %v365 = vunpack.c.l.b16 %v294
    %v366 = vunpack.c.l.b16 %v295
    %v367 = vunpack.c.l.b16 %v296
    %v368 = vunpack.c.l.b16 %v297
    %v369 = vunpack.c.l.b16 %v298
    %v370 = vunpack.c.l.b16 %v299
    %v371 = vunpack.c.l.b16 %v300
    %v372 = vunpack.c.l.b16 %v301
    %v373 = vunpack.c.l.b16 %v302
    %v374 = vunpack.c.l.b16 %v303
    %v375 = vunpack.c.l.b16 %v304
    %v376 = vunpack.c.l.b16 %v305
    %v377 = vunpack.c.l.b16 %v306
    %v378 = vunpack.c.l.b16 %v307
    %v379 = vunpack.c.l.b16 %v308
    %v380 = vunpack.c.l.b16 %v309
    %v381 = vunpack.c.l.b16 %v310
    %v382 = vunpack.c.l.b16 %v311
    %v383 = vunpack.c.l.b16 %v312
    %v384 = vunpack.c.l.b16 %v313
    %v385 = vunpack.c.l.b16 %v314
    %v386 = vunpack.c.l.b16 %v315
    %v387 = vunpack.c.l.b16 %v316
    %v388 = vunpack.c.l.b16 %v317
    %v389 = vunpack.c.l.b16 %v318
    %v390 = vunpack.c.l.b16 %v319
    %v391 = vunpack.c.l.b16 %v320
    %v392 = vunpack.c.l.b16 %v321
    %v393 = vunpack.c.l.b16 %v322
    %v394 = vunpack.c.l.b16 %v323
    %v395 = vpack.c.b16 %v364, %v363
    %v396 = vpack.c.b16 %v366, %v365
    %v397 = vpack.c.b16 %v368, %v367
    %v398 = vpack.c.b16 %v370, %v369
    %v399 = vpack.c.b16 %v372, %v371
    %v400 = vpack.c.b16 %v374, %v373
    %v401 = vpack.c.b16 %v376, %v375
    %v402 = vpack.c.b16 %v378, %v377
    %v403 = vpack.c.b16 %v380, %v379
    %v404 = vpack.c.b16 %v382, %v381
    %v405 = vpack.c.b16 %v384, %v383
    %v406 = vpack.c.b16 %v386, %v385
    %v407 = vpack.c.b16 %v388, %v387
    %v408 = vpack.c.b16 %v390, %v389
    %v409 = vpack.c.b16 %v392, %v391
    %v410 = vpack.c.b16 %v394, %v393
    %427 = vmatpush.bf16.msra.mxu0 %v402
    %428 = vmatpush.bf16.msra.mxu0 %v401
    %429 = vmatpush.bf16.msra.mxu0 %v400
    %430 = vmatpush.bf16.msra.mxu0 %v399
    %431 = vmatpush.bf16.msra.mxu0 %v398
    %432 = vmatpush.bf16.msra.mxu0 %v397
    %433 = vmatpush.bf16.msra.mxu0 %v396
    %434 = vmatpush.bf16.msra.mxu0 %v395
    %435 = vmatmul.bf16.gmra.mxu0 %v327
    %v436 = vpop.f32.mrf.mxu0
    %v437 = vadd.f32 0.0, %v436
    %v438 = vpop.f32.mrf.mxu0
    %439 = vdwg.mxu0
    %440 = vmatpush.bf16.msra.mxu0 %v410
    %441 = vmatpush.bf16.msra.mxu0 %v409
    %442 = vmatpush.bf16.msra.mxu0 %v408
    %443 = vmatpush.bf16.msra.mxu0 %v407
    %444 = vmatpush.bf16.msra.mxu0 %v406
    %445 = vmatpush.bf16.msra.mxu0 %v405
    %446 = vmatpush.bf16.msra.mxu0 %v404
    %447 = vmatpush.bf16.msra.mxu0 %v403
    %448 = vmatmul.bf16.gmra.mxu0 %v328
    %v449 = vpop.f32.mrf.mxu0
    %v450 = vadd.f32 %v437, %v449
    %v451 = vpop.f32.mrf.mxu0
    %452 = vdwg.mxu0
    %v453 = vadd.f32 %v291, %v450
    %454 = vst [vmem:[#allocation11] sm:$0xff] %v453
    // Predicated region
    $region50: #{tpu_custom_call.1} parent=1 // pred_check
      _
    $region51: #{tpu_custom_call.1} parent=1 // pred_check_branch
      %456 = sbr.rel (0) target = $region53
    $region52: #{tpu_custom_call.1} parent=1 // pred_region
      %458 = vsyncadd [#allocation5], 0
      %s460 = sshll.u32 [#allocation11], 4
      %s461 = int_to_ptr.vmem [resolvable:$true] %s460
      %s462 = sshll.u32 %s6, 4
      %s463 = int_to_ptr.hbm [resolvable:$true] %s462
      %465 = dma.vmem_to_hbm [thread:$0]  %s461, 128, %s463, [#allocation5]
    $region53: #{tpu_custom_call.1} parent=1 // pred_fallthru
      _
    // Predicated region
    $region54: #{tpu_custom_call.1} parent=1 // pred_check
      _
    $region55: #{tpu_custom_call.1} parent=1 // pred_check_branch
      %467 = sbr.rel (0) target = $region57
    $region56: #{tpu_custom_call.1} parent=1 // pred_region
      %469 = dma.done [#allocation5], 128
    $region57: #{tpu_custom_call.1} parent=1 // pred_fallthru
      _
    %470 = vsyncpa [#allocation4], 1
    %471 = vsyncpa [#allocation7], 1
    %472 = vsyncpa [#allocation10], 1
    %473 = vsyncpa [#allocation5], 1

</llo_original>
